<compile_context>
chip_gen: v7x
topology: tpu7x:2x2x1
jax: 0.10.0
libtpu: 0.0.40
codegen_flags: <defaults>
</compile_context>

<pallas_src>
import jax
import jax.numpy as jnp
from jax.experimental import pallas as pl
from jax.experimental.pallas import tpu as pltpu


# ----------------------------------------------------------------------------
# Glue: PCA-based pairwise cosine similarity (sklearn PCA equivalent).
# ----------------------------------------------------------------------------
def pairwise_cosine_sim(vec, matrix):
    # sklearn PCA(n_components=P).fit_transform on a (P, D) matrix:
    #   center rows, project on the top-P right singular vectors.
    # TODO(synk): the zero-variance (last) principal direction is arbitrary in
    # LAPACK; PCA is done with jnp.linalg.svd in plain JAX (tiny problem).
    mean = jnp.mean(matrix, axis=0)
    cm = matrix - mean                                  # (P, D)
    _, _, vt = jnp.linalg.svd(cm, full_matrices=False)  # (P, D) components
    pca_matrix = cm @ vt.T                              # (P, P)
    pca_vec = (vec - mean) @ vt.T                       # (P,)
    dot = pca_matrix @ pca_vec
    denom = jnp.linalg.norm(pca_vec) * jnp.linalg.norm(pca_matrix, axis=1)
    cos = dot / denom
    return jnp.where(jnp.isnan(cos), 0.0, cos)


# ----------------------------------------------------------------------------
# Pallas kernel: per-pixel LGKD terms, lane-dense, minimal (C, tile) temps.
# ----------------------------------------------------------------------------
def _make_lgkd_kernel(c_old, c_new, tile, hw, alpha, prev_kd, novel_kd, delta):
    # r_map entries for novel classes are 1.0 in the reference; they only
    # scale the bg-at-target term and survive thresholding iff 1 >= delta.
    nov_scale = 1.0 if 1.0 >= delta else 0.0
    ragged = (hw % tile) != 0
    gstart = (c_old // 8) * 8          # 8-aligned start of the gather slice
    n_hi = c_new - gstart              # rows actually scanned by the gather

    def kernel(tgt_ref, new_ref, old_ref, rmap_ref, out_ref):
        t = tgt_ref[0]                                    # (1, tile) int32
        new = new_ref[0].astype(jnp.float32)              # (c_new, tile)
        old = old_ref[0].astype(jnp.float32)              # (c_old, tile)
        rmap0 = rmap_ref[...]                             # (c_old, 1), bg row = 0

        # validity: ignore label + (ragged) spatial bound
        valid = t != 255                                  # (1, tile)
        if ragged:
            lane = jax.lax.broadcasted_iota(jnp.int32, (1, tile), 1)
            pos = pl.program_id(0) * tile + lane
            valid = jnp.logical_and(valid, pos < hw)
        novel = jnp.logical_and(valid, t >= c_old)
        prev = jnp.logical_and(valid, t < c_old)

        # unnormalized old softmax (normalization factored out to the end)
        old_s = old * alpha if alpha != 1.0 else old
        m_old = jnp.max(old_s, axis=0, keepdims=True)     # (1, tile)
        e_old = jnp.exp(old_s - m_old)                    # (c_old, tile)
        denom = jnp.sum(e_old, axis=0, keepdims=True)     # (1, tile)
        bg_e = e_old[0:1, :]                              # (1, tile)
        reweight = old_s[0:1, :] != m_old                 # bg not the argmax

        # log-softmax pieces of new logits over all c_new classes
        m_new = jnp.max(new, axis=0, keepdims=True)
        lse = m_new + jnp.log(jnp.sum(jnp.exp(new - m_new), axis=0,
                                      keepdims=True))     # (1, tile)

        # the only two full (c_old, tile) products per step
        P = e_old * (new[:c_old, :] - lse)                # e_old * log p_new
        s_all = jnp.sum(P, axis=0, keepdims=True)         # incl. bg row (prev)
        s_nobg = s_all - P[0:1, :]                        # bg row removed
        s_rw = jnp.sum(rmap0 * P, axis=0, keepdims=True)  # rmap-weighted, no bg

        # new logit at the (novel) target class: aligned restricted gather.
        # Only consumed under the `novel` gate, so prev/ignore aliases are safe.
        row = gstart + jax.lax.broadcasted_iota(jnp.int32, (n_hi, tile), 0)
        new_at_t = jnp.sum(jnp.where(row == t, new[gstart:, :], 0.0),
                           axis=0, keepdims=True)         # (1, tile)
        bg_term = bg_e * (new_at_t - lse)                 # bg prob at target cls

        if nov_scale == 1.0:
            rw_branch = s_rw + bg_term
        elif nov_scale == 0.0:
            rw_branch = s_rw
        else:
            rw_branch = s_rw + nov_scale * bg_term
        nov_sum = jnp.where(reweight, rw_branch, s_nobg + bg_term)

        blend = (jnp.where(prev, prev_kd * s_all, 0.0)
                 + jnp.where(novel, novel_kd * nov_sum, 0.0))
        res = blend / denom                               # exact normalization
        if ragged:
            res = jnp.where(valid, res, 0.0)              # kill OOB garbage lanes
        out_ref[...] = res[None, None]                    # (1, 1, 1, tile)

    return kernel


# ----------------------------------------------------------------------------
# Wrapper: r_map glue + pallas_call (NCHW fed directly, lane-dense tiling).
# ----------------------------------------------------------------------------
def lgkd_loss_pallas(new_logits, old_logits, targets, batch_prototypes,
                     prototypes, temperature=3.0, delta=0.5, reduction="mean",
                     alpha=1.0, prev_kd=1.0, novel_kd=0.0, tile_hw=None,
                     cast_logits_to_bf16=False):
    B, c_new, H, W = new_logits.shape
    c_old = old_logits.shape[1]
    HW = H * W

    # ---- small glue over the int targets (single tiny pass) ----------------
    t_flat = targets.reshape(-1).astype(jnp.int32)
    valid = t_flat != 255
    novel = jnp.logical_and(valid, t_flat >= c_old)
    n_valid = jnp.sum(valid).astype(jnp.float32)
    # NOTE: the reference remaps targets < c_old to 0; that remap is a no-op
    # for the loss math, so it is skipped to save an HBM pass.
    # TODO(synk): the reference errors when no novel pixel exists; we assume >= 1.
    first_novel = jnp.argmax(novel)
    proto0 = batch_prototypes[t_flat[first_novel]].astype(jnp.float32)
    r = pairwise_cosine_sim(proto0, prototypes.astype(jnp.float32))
    r = jnp.where(r < delta, 0.0, r)
    r = r.at[0].set(0.0)           # bg column never contributes (w[:, 0] = 0)
    r_map = r.astype(jnp.float32).reshape(c_old, 1)

    # Optional HBM saving: in an end-to-end jit this cast fuses into the
    # logits producer; the kernel upcasts to f32 on load either way.
    if cast_logits_to_bf16 and new_logits.dtype == jnp.float32:
        new_logits = new_logits.astype(jnp.bfloat16)
        old_logits = old_logits.astype(jnp.bfloat16)

    # ---- NCHW fed directly: free reshape, no transpose, no pad -------------
    new_r = new_logits.reshape(B, c_new, HW)
    old_r = old_logits.reshape(B, c_old, HW)
    tgt_r = targets.reshape(B, 1, HW).astype(jnp.int32)

    # ---- lane-dense spatial tiling, sized from class count & VMEM budget ---
    in_b = jnp.dtype(new_r.dtype).itemsize
    hw_full = ((HW + 127) // 128) * 128
    if tile_hw is None:
        # double-buffered inputs + ~f32 temporaries per lane, ~24 MiB budget
        per_lane = 2 * in_b * (c_old + c_new + 2) + 4 * (3 * c_old + 3 * c_new + 16)
        tile = (24 * 1024 * 1024) // per_lane
        tile = max(512, min((tile // 128) * 128, 32768))
    else:
        tile = max(128, (tile_hw // 128) * 128)
    tile = min(tile, hw_full)
    n_tiles = pl.cdiv(HW, tile)

    est_vmem = (2 * tile * (4 + in_b * (c_old + c_new)) + 2 * tile * 4
                + 4 * tile * (3 * c_old + 3 * c_new + 16))
    vmem_limit = int(min(max(est_vmem * 5 // 4, 32 << 20), 48 << 20))

    kernel = _make_lgkd_kernel(int(c_old), int(c_new), int(tile), int(HW),
                               float(alpha), float(prev_kd), float(novel_kd),
                               float(delta))

    partial = pl.pallas_call(
        kernel,
        out_shape=jax.ShapeDtypeStruct((n_tiles, B, 1, tile), jnp.float32),
        grid_spec=pltpu.PrefetchScalarGridSpec(
            num_scalar_prefetch=0,
            grid=(n_tiles, B),
            in_specs=[
                pl.BlockSpec((1, 1, tile), lambda i, b: (b, 0, i)),
                pl.BlockSpec((1, c_new, tile), lambda i, b: (b, 0, i)),
                pl.BlockSpec((1, c_old, tile), lambda i, b: (b, 0, i)),
                pl.BlockSpec((c_old, 1), lambda i, b: (0, 0)),
            ],
            out_specs=pl.BlockSpec((1, 1, 1, tile), lambda i, b: (i, b, 0, 0)),
        ),
        compiler_params=pltpu.CompilerParams(
            dimension_semantics=("parallel", "parallel"),
            vmem_limit_bytes=vmem_limit),
    )(tgt_r, new_r, old_r, r_map)

    total = jnp.sum(partial)           # tiny tree-reduce of per-block partials
    if reduction == "mean":
        return -total / n_valid
    elif reduction == "sum":
        return -total
    else:
        # TODO(synk): 'none' reduction (per-pixel loss in compacted prev/novel
        # concatenation order) is not emitted by this sum-reducing kernel.
        raise NotImplementedError("reduction='none' not supported")


# ----------------------------------------------------------------------------
# Pure-JAX reference (mirror of the PyTorch forward) for correctness check.
# ----------------------------------------------------------------------------
def lgkd_loss_ref(new_logits, old_logits, targets, batch_prototypes, prototypes,
                  delta=0.5, alpha=1.0, prev_kd=1.0, novel_kd=0.5):
    B, c_new, H, W = new_logits.shape
    c_old = old_logits.shape[1]
    new_cl = c_new - c_old
    new_f = jnp.transpose(new_logits, (0, 2, 3, 1)).reshape(-1, c_new)
    old_f = jnp.transpose(old_logits, (0, 2, 3, 1)).reshape(-1, c_old)
    t = targets.reshape(-1).astype(jnp.int32)
    t = jnp.where(t < c_old, 0, t)
    valid = t != 255
    novel = valid & (t >= c_old)
    prev = valid & (t < c_old)
    n_valid = jnp.sum(valid).astype(jnp.float32)

    first = jnp.argmax(novel)
    proto0 = batch_prototypes[t[first]]
    r = pairwise_cosine_sim(proto0, prototypes)
    r_map = jnp.concatenate([r, jnp.ones((new_cl,), r.dtype)], axis=0)
    r_map = jnp.where(r_map < delta, 0.0, r_map)

    prob = jax.nn.softmax(old_f * alpha, axis=1)
    bg = prob[:, 0]
    maxp = jnp.max(prob, axis=1)
    w_prev = jnp.concatenate(
        [prob, jnp.zeros((prob.shape[0], new_cl), prob.dtype)], axis=1)
    col = jnp.arange(c_new)[None, :]
    w_nov = jnp.where(col == t[:, None], bg[:, None], w_prev)
    w_nov = jnp.where((bg != maxp)[:, None], w_nov * r_map[None, :], w_nov)
    w_nov = w_nov.at[:, 0].set(0.0)

    log_p = new_f - jax.scipy.special.logsumexp(new_f, axis=1, keepdims=True)
    lp = jnp.sum(w_prev * log_p, axis=1)
    ln = jnp.sum(w_nov * log_p, axis=1)
    contrib = (jnp.where(prev, prev_kd * lp, 0.0)
               + jnp.where(novel, novel_kd * ln, 0.0))
    return -jnp.sum(contrib) / n_valid


def _make_inputs(key, B, C_OLD, C_NEW, D, H, W):
    k1, k2, k3, k4, k5 = jax.random.split(key, 5)
    new_logits = jax.random.normal(k1, (B, C_NEW, H, W), jnp.float32)
    old_logits = jax.random.normal(k2, (B, C_OLD, H, W), jnp.float32)
    targets = jax.random.randint(k3, (B, H, W), 0, C_NEW + 1)
    targets = jnp.where(targets == C_NEW, 255, targets)   # some ignore pixels
    targets = targets.at[0, 0, 0].set(C_OLD)              # guarantee a novel pixel
    targets = targets.astype(jnp.int32)
    prototypes = jax.random.normal(k4, (C_OLD, D), jnp.float32)
    batch_prototypes = jax.random.normal(k5, (C_NEW, D), jnp.float32)
    return new_logits, old_logits, targets, batch_prototypes, prototypes


def _check(out, ref, tag):
    out_f, ref_f = float(out), float(ref)
    assert jnp.isfinite(out), f"[{tag}] non-finite output: {out_f}"
    assert abs(out_f - ref_f) <= 1e-3 * max(1.0, abs(ref_f)), \
        f"[{tag}] mismatch: pallas={out_f} ref={ref_f}"


if __name__ == "__main__":
    key = jax.random.PRNGKey(0)
    B, C_OLD, C_NEW, D = 2, 6, 10, 32

    # --- test 1: H*W a multiple of the tile (fast path, auto tile) ----------
    nl, ol, tg, bp, pr = _make_inputs(key, B, C_OLD, C_NEW, D, 16, 16)
    out = lgkd_loss_pallas(nl, ol, tg, bp, pr, temperature=3.0, delta=0.5,
                           reduction="mean", alpha=1.0, prev_kd=1.0,
                           novel_kd=0.5)
    out = jax.block_until_ready(out)
    ref = lgkd_loss_ref(nl, ol, tg, bp, pr, delta=0.5, alpha=1.0,
                        prev_kd=1.0, novel_kd=0.5)
    ref = jax.block_until_ready(ref)
    _check(out, ref, "even")

    # --- test 2: ragged H*W + multi-tile (in-kernel lane-bound masking) -----
    nl2, ol2, tg2, bp2, pr2 = _make_inputs(jax.random.PRNGKey(1),
                                           B, C_OLD, C_NEW, D, 20, 20)
    out2 = lgkd_loss_pallas(nl2, ol2, tg2, bp2, pr2, temperature=3.0,
                            delta=0.5, reduction="mean", alpha=1.0,
                            prev_kd=1.0, novel_kd=0.5, tile_hw=128)
    out2 = jax.block_until_ready(out2)
    ref2 = lgkd_loss_ref(nl2, ol2, tg2, bp2, pr2, delta=0.5, alpha=1.0,
                         prev_kd=1.0, novel_kd=0.5)
    ref2 = jax.block_until_ready(ref2)
    _check(out2, ref2, "ragged")

    print("KERNEL_OK")
</pallas_src>

<mosaic_0001>
module attributes {stable_mosaic.version = 11 : i64} {
  func.func @kernel(%arg0: i32, %arg1: i32, %arg2: memref<1x1x256xi32, #tpu.memory_space<vmem>>, %arg3: memref<1x10x256xf32, #tpu.memory_space<vmem>>, %arg4: memref<1x6x256xf32, #tpu.memory_space<vmem>>, %arg5: memref<6x1xf32, #tpu.memory_space<vmem>>, %arg6: memref<1x1x1x256xf32, #tpu.memory_space<vmem>>) attributes {dimension_semantics = [#tpu.dimension_semantics<parallel>, #tpu.dimension_semantics<parallel>], iteration_bounds = array<i64: 1, 2>, scalar_prefetch = 0 : i64, scratch_operands = 0 : i64, tpu.core_type = #tpu.core_type<tc>, window_params = [{transform_indices = @transform_0, window_bounds = array<i64: 1, 1, 256>}, {transform_indices = @transform_1, window_bounds = array<i64: 1, 10, 256>}, {transform_indices = @transform_2, window_bounds = array<i64: 1, 6, 256>}, {pipeline_mode = #tpu.pipeline_mode<synchronous>, transform_indices = @transform_3, window_bounds = array<i64: 6, 1>}, {transform_indices = @transform_4, window_bounds = array<i64: 1, 1, 1, 256>}]} {
    %c0 = arith.constant 0 : index
    %c0_0 = arith.constant 0 : index
    %c0_1 = arith.constant 0 : index
    %0 = vector.load %arg2[%c0, %c0_0, %c0_1] : memref<1x1x256xi32, #tpu.memory_space<vmem>>, vector<1x1x256xi32>
    %1 = vector.shape_cast %0 : vector<1x1x256xi32> to vector<1x256xi32>
    %c0_2 = arith.constant 0 : index
    %c0_3 = arith.constant 0 : index
    %c0_4 = arith.constant 0 : index
    %2 = vector.load %arg3[%c0_2, %c0_3, %c0_4] : memref<1x10x256xf32, #tpu.memory_space<vmem>>, vector<1x10x256xf32>
    %3 = vector.shape_cast %2 : vector<1x10x256xf32> to vector<10x256xf32>
    %c0_5 = arith.constant 0 : index
    %c0_6 = arith.constant 0 : index
    %c0_7 = arith.constant 0 : index
    %4 = vector.load %arg4[%c0_5, %c0_6, %c0_7] : memref<1x6x256xf32, #tpu.memory_space<vmem>>, vector<1x6x256xf32>
    %5 = vector.shape_cast %4 : vector<1x6x256xf32> to vector<6x256xf32>
    %c0_8 = arith.constant 0 : index
    %c0_9 = arith.constant 0 : index
    %6 = vector.load %arg5[%c0_8, %c0_9] : memref<6x1xf32, #tpu.memory_space<vmem>>, vector<6x1xf32>
    %c255_i32 = arith.constant 255 : i32
    %7 = vector.broadcast %c255_i32 : i32 to vector<1x256xi32>
    %8 = arith.cmpi ne, %1, %7 : vector<1x256xi32>
    %c6_i32 = arith.constant 6 : i32
    %9 = vector.broadcast %c6_i32 : i32 to vector<1x256xi32>
    %10 = arith.cmpi sge, %1, %9 : vector<1x256xi32>
    %11 = arith.andi %8, %10 : vector<1x256xi1>
    %c6_i32_10 = arith.constant 6 : i32
    %12 = vector.broadcast %c6_i32_10 : i32 to vector<1x256xi32>
    %13 = arith.cmpi slt, %1, %12 : vector<1x256xi32>
    %14 = arith.andi %8, %13 : vector<1x256xi1>
    %cst = arith.constant dense<0xFF800000> : vector<256xf32>
    %15 = vector.multi_reduction <maximumf>, %5, %cst [0] : vector<6x256xf32> to vector<256xf32>
    %16 = vector.shape_cast %15 : vector<256xf32> to vector<1x256xf32>
    %17 = vector.broadcast %16 : vector<1x256xf32> to vector<6x256xf32>
    %18 = arith.subf %5, %17 : vector<6x256xf32>
    %19 = math.exp %18 : vector<6x256xf32>
    %cst_11 = arith.constant dense<0.000000e+00> : vector<256xf32>
    %20 = vector.multi_reduction <add>, %19, %cst_11 [0] : vector<6x256xf32> to vector<256xf32>
    %21 = vector.shape_cast %20 : vector<256xf32> to vector<1x256xf32>
    %22 = vector.extract_strided_slice %19 {offsets = [0, 0], sizes = [1, 256], strides = [1, 1]} : vector<6x256xf32> to vector<1x256xf32>
    %23 = vector.extract_strided_slice %5 {offsets = [0, 0], sizes = [1, 256], strides = [1, 1]} : vector<6x256xf32> to vector<1x256xf32>
    %24 = arith.cmpf one, %23, %16 : vector<1x256xf32>
    %cst_12 = arith.constant dense<0xFF800000> : vector<256xf32>
    %25 = vector.multi_reduction <maximumf>, %3, %cst_12 [0] : vector<10x256xf32> to vector<256xf32>
    %26 = vector.shape_cast %25 : vector<256xf32> to vector<1x256xf32>
    %27 = vector.broadcast %26 : vector<1x256xf32> to vector<10x256xf32>
    %28 = arith.subf %3, %27 : vector<10x256xf32>
    %29 = math.exp %28 : vector<10x256xf32>
    %cst_13 = arith.constant dense<0.000000e+00> : vector<256xf32>
    %30 = vector.multi_reduction <add>, %29, %cst_13 [0] : vector<10x256xf32> to vector<256xf32>
    %31 = vector.shape_cast %30 : vector<256xf32> to vector<1x256xf32>
    %32 = math.log %31 : vector<1x256xf32>
    %33 = arith.addf %26, %32 : vector<1x256xf32>
    %34 = vector.extract_strided_slice %3 {offsets = [0, 0], sizes = [6, 256], strides = [1, 1]} : vector<10x256xf32> to vector<6x256xf32>
    %35 = vector.broadcast %33 : vector<1x256xf32> to vector<6x256xf32>
    %36 = arith.subf %34, %35 : vector<6x256xf32>
    %37 = arith.mulf %19, %36 : vector<6x256xf32>
    %cst_14 = arith.constant dense<0.000000e+00> : vector<256xf32>
    %38 = vector.multi_reduction <add>, %37, %cst_14 [0] : vector<6x256xf32> to vector<256xf32>
    %39 = vector.shape_cast %38 : vector<256xf32> to vector<1x256xf32>
    %40 = vector.extract_strided_slice %37 {offsets = [0, 0], sizes = [1, 256], strides = [1, 1]} : vector<6x256xf32> to vector<1x256xf32>
    %41 = arith.subf %39, %40 : vector<1x256xf32>
    %42 = vector.broadcast %6 : vector<6x1xf32> to vector<6x256xf32>
    %43 = arith.mulf %42, %37 : vector<6x256xf32>
    %cst_15 = arith.constant dense<0.000000e+00> : vector<256xf32>
    %44 = vector.multi_reduction <add>, %43, %cst_15 [0] : vector<6x256xf32> to vector<256xf32>
    %45 = vector.shape_cast %44 : vector<256xf32> to vector<1x256xf32>
    %46 = tpu.iota {dimensions = array<i32: 0>} : vector<10x256xi32>
    %c0_i32 = arith.constant 0 : i32
    %47 = vector.broadcast %c0_i32 : i32 to vector<10x256xi32>
    %48 = arith.addi %47, %46 : vector<10x256xi32>
    %49 = vector.broadcast %1 : vector<1x256xi32> to vector<10x256xi32>
    %50 = arith.cmpi eq, %48, %49 : vector<10x256xi32>
    %cst_16 = arith.constant 0.000000e+00 : f32
    %51 = vector.broadcast %cst_16 : f32 to vector<10x256xf32>
    %52 = arith.select %50, %3, %51 : vector<10x256xi1>, vector<10x256xf32>
    %cst_17 = arith.constant dense<0.000000e+00> : vector<256xf32>
    %53 = vector.multi_reduction <add>, %52, %cst_17 [0] : vector<10x256xf32> to vector<256xf32>
    %54 = vector.shape_cast %53 : vector<256xf32> to vector<1x256xf32>
    %55 = arith.subf %54, %33 : vector<1x256xf32>
    %56 = arith.mulf %22, %55 : vector<1x256xf32>
    %57 = arith.addf %45, %56 : vector<1x256xf32>
    %58 = arith.addf %41, %56 : vector<1x256xf32>
    %59 = arith.select %24, %57, %58 : vector<1x256xi1>, vector<1x256xf32>
    %cst_18 = arith.constant 1.000000e+00 : f32
    %60 = vector.broadcast %cst_18 : f32 to vector<1x256xf32>
    %61 = arith.mulf %60, %39 : vector<1x256xf32>
    %cst_19 = arith.constant 0.000000e+00 : f32
    %62 = vector.broadcast %cst_19 : f32 to vector<1x256xf32>
    %63 = arith.select %14, %61, %62 : vector<1x256xi1>, vector<1x256xf32>
    %cst_20 = arith.constant 5.000000e-01 : f32
    %64 = vector.broadcast %cst_20 : f32 to vector<1x256xf32>
    %65 = arith.mulf %64, %59 : vector<1x256xf32>
    %cst_21 = arith.constant 0.000000e+00 : f32
    %66 = vector.broadcast %cst_21 : f32 to vector<1x256xf32>
    %67 = arith.select %11, %65, %66 : vector<1x256xi1>, vector<1x256xf32>
    %68 = arith.addf %63, %67 : vector<1x256xf32>
    %69 = arith.divf %68, %21 : vector<1x256xf32>
    %70 = vector.shape_cast %69 : vector<1x256xf32> to vector<1x1x1x256xf32>
    %c0_22 = arith.constant 0 : index
    %c0_23 = arith.constant 0 : index
    %c0_24 = arith.constant 0 : index
    %c0_25 = arith.constant 0 : index
    %71 = vector.load %arg6[%c0_22, %c0_23, %c0_24, %c0_25] : memref<1x1x1x256xf32, #tpu.memory_space<vmem>>, vector<1x1x1x256xf32>
    tpu.vector_store %arg6[%c0_22, %c0_23, %c0_24, %c0_25], %70 {strides = array<i32>} : memref<1x1x1x256xf32, #tpu.memory_space<vmem>>, vector<1x1x1x256xf32>,
    return
  }
  func.func @transform_0(%arg0: i32, %arg1: i32) -> (i32, i32, i32) {
    %c0_i32 = arith.constant 0 : i32
    %c0_i32_0 = arith.constant 0 : i32
    return %arg1, %c0_i32, %arg0 : i32, i32, i32
  }
  func.func @transform_1(%arg0: i32, %arg1: i32) -> (i32, i32, i32) {
    %c0_i32 = arith.constant 0 : i32
    %c0_i32_0 = arith.constant 0 : i32
    return %arg1, %c0_i32, %arg0 : i32, i32, i32
  }
  func.func @transform_2(%arg0: i32, %arg1: i32) -> (i32, i32, i32) {
    %c0_i32 = arith.constant 0 : i32
    %c0_i32_0 = arith.constant 0 : i32
    return %arg1, %c0_i32, %arg0 : i32, i32, i32
  }
  func.func @transform_3(%arg0: i32, %arg1: i32) -> (i32, i32) {
    %c0_i32 = arith.constant 0 : i32
    %c0_i32_0 = arith.constant 0 : i32
    %c0_i32_1 = arith.constant 0 : i32
    return %c0_i32, %c0_i32_0 : i32, i32
  }
  func.func @transform_4(%arg0: i32, %arg1: i32) -> (i32, i32, i32, i32) {
    %c0_i32 = arith.constant 0 : i32
    %c0_i32_0 = arith.constant 0 : i32
    %c0_i32_1 = arith.constant 0 : i32
    return %arg0, %arg1, %c0_i32, %c0_i32_0 : i32, i32, i32, i32
  }
}

</mosaic_0001>

<llo_original>
// kernel: tpu_custom_call.1
$region0: #{tpu_custom_call.1}
  #allocation0 [shape = 'u32[]', space=smem, size = 0x4, offset = 0x4, fixed_abs, tag = 'smem constant byte address 0x4 - core index']
  #allocation1 [shape = 'u32[144,128]{1,0:T(1,128)}', space=vmem, size = 0x12000, scoped, tag = 'internal scratch']
  %s0 = inlined_call_operand.vmem [shape: s32[2,1,256], index: 0, kind: input, shape index: {}]
  %s1 = inlined_call_operand.vmem [shape: f32[2,10,256], index: 1, kind: input, shape index: {}]
  %s2 = inlined_call_operand.vmem [shape: f32[2,6,256], index: 2, kind: input, shape index: {}]
  %s3 = inlined_call_operand.vmem [shape: f32[6,1], index: 3, kind: input, shape index: {}]
  %s4 = inlined_call_operand.hbm [shape: f32[1,2,1,256], index: 4, kind: output, shape index: {}]
  %s5 = sld [smem:[#allocation0]]
  $region49: #{tpu_custom_call.1} parent=0
    _
  %s7 = ssub.s32 1, %s5
  %s8 = scalar_select 0, %s7, %s5
  $region1: #{tpu_custom_call.1} parent=0
    #allocation2 [shape = 'u8[2048]{0}', space=vmem, size = 0x800, scoped, tag = 'output window, operand 0']
    #allocation3 [shape = 's32[2]{0}', space=sflag, size = 0x8, scoped, tag = 'scoped memory for tpu_custom_call.1']
    %9 = vsyncpa [#allocation3], 0
    %s10 = scalar_lea.sflag [#allocation3], 1
    %11 = vsyncpa %s10, 0
    loop: start=0, step=1, limit=4
    $region2: #{tpu_custom_call.1} parent=1 // loop_pre_header
      _
    $region3: #{tpu_custom_call.1} parent=1 // loop_header
      %s13 = sphi 0, %s17
      %p14 = scmp.ge.s32.totalorder %s13, 4
      %s20 = sphi 0, %s32
      %s21 = sphi 0, %s28
      %s22 = sphi 0, %s20
      %s23 = sphi 0, %s21
      %s24 = sphi 0, %s22
      %s25 = sphi 0, %s23
      %s37 = sphi 0, %s39
      %s40 = sphi 0, %s37
      %s41 = sphi 0, %s40
      %s57 = sphi 0, %s41
      %s65 = sphi 0, %s67
      %s68 = sphi 0, %s65
      %s69 = sphi 0, %s68
      %s85 = sphi 0, %s69
      %s93 = sphi 0, %s95
      %s96 = sphi 0, %s93
      %s97 = sphi 0, %s96
      %s113 = sphi 0, %s97
      %s117 = sphi 0, %s117
      %s119 = sphi 0, %s117
      %s120 = sphi 0, %s119
      %s134 = sphi 0, %s120
      %s142 = sphi 0, %s144
      %s145 = sphi 0, %s142
      %s146 = sphi 0, %s145
      %s162 = sphi 0, %s146
    $region4: #{tpu_custom_call.1} parent=1 // loop_header_branch
      %16 = sbr.rel (%p14) target = $region8
    $region5: #{tpu_custom_call.1} parent=1 // loop_body
      %s18 = ssub.s32 %s13, 1
      %s19 = ssub.s32 %s13, 2
      %s26 = sadd.s32 1, %s21
      %p27 = scmp.ge.s32.totalorder %s26, 2
      %s28 = scalar_select %p27, 0, %s26
      %s29 = sadd.s32 1, %s20
      %s30 = scalar_select %p27, %s29, %s20
      %p31 = scmp.ge.s32.totalorder %s30, 1
      %s32 = scalar_select %p31, 0, %s30
      %s33 = ssub.s32 %s21, %s28
      %s34 = ssub.s32 %s20, %s32
      %s35 = sor.u32 %s33, %s34
      %p36 = scmp.eq.s32.totalorder %s35, 0
      %s38 = sadd.s32 %s37, 1
      %s39 = scalar_select %p36, %s37, %s38
      %p42 = pneg %p36
      %p43 = scmp.eq.s32.totalorder %s13, 1
      %p44 = por %p42, %p43
      %p45 = scmp.ne.s32.totalorder %s37, %s40
      %p46 = scmp.eq.s32.totalorder %s13, 0
      %p47 = por %p45, %p46
      %p48 = scmp.ne.s32.totalorder %s37, %s40
      %p49 = scmp.eq.s32.totalorder %s18, 1
      %p50 = por %p48, %p49
      %p51 = scmp.ne.s32.totalorder %s40, %s41
      %p52 = scmp.eq.s32.totalorder %s18, 0
      %p53 = por %p51, %p52
      %p54 = scmp.ne.s32.totalorder %s40, %s41
      %p55 = scmp.eq.s32.totalorder %s19, 1
      %p56 = por %p54, %p55
      %p58 = scmp.ne.s32.totalorder %s41, %s57
      %p59 = scmp.eq.s32.totalorder %s19, 0
      %p60 = por %p58, %p59
      %s61 = ssub.s32 %s21, %s28
      %s62 = ssub.s32 %s20, %s32
      %s63 = sor.u32 %s61, %s62
      %p64 = scmp.eq.s32.totalorder %s63, 0
      %s66 = sadd.s32 %s65, 1
      %s67 = scalar_select %p64, %s65, %s66
      %p70 = pneg %p64
      %p71 = scmp.eq.s32.totalorder %s13, 1
      %p72 = por %p70, %p71
      %p73 = scmp.ne.s32.totalorder %s65, %s68
      %p74 = scmp.eq.s32.totalorder %s13, 0
      %p75 = por %p73, %p74
      %p76 = scmp.ne.s32.totalorder %s65, %s68
      %p77 = scmp.eq.s32.totalorder %s18, 1
      %p78 = por %p76, %p77
      %p79 = scmp.ne.s32.totalorder %s68, %s69
      %p80 = scmp.eq.s32.totalorder %s18, 0
      %p81 = por %p79, %p80
      %p82 = scmp.ne.s32.totalorder %s68, %s69
      %p83 = scmp.eq.s32.totalorder %s19, 1
      %p84 = por %p82, %p83
      %p86 = scmp.ne.s32.totalorder %s69, %s85
      %p87 = scmp.eq.s32.totalorder %s19, 0
      %p88 = por %p86, %p87
      %s89 = ssub.s32 %s21, %s28
      %s90 = ssub.s32 %s20, %s32
      %s91 = sor.u32 %s89, %s90
      %p92 = scmp.eq.s32.totalorder %s91, 0
      %s94 = sadd.s32 %s93, 1
      %s95 = scalar_select %p92, %s93, %s94
      %p98 = pneg %p92
      %p99 = scmp.eq.s32.totalorder %s13, 1
      %p100 = por %p98, %p99
      %p101 = scmp.ne.s32.totalorder %s93, %s96
      %p102 = scmp.eq.s32.totalorder %s13, 0
      %p103 = por %p101, %p102
      %p104 = scmp.ne.s32.totalorder %s93, %s96
      %p105 = scmp.eq.s32.totalorder %s18, 1
      %p106 = por %p104, %p105
      %p107 = scmp.ne.s32.totalorder %s96, %s97
      %p108 = scmp.eq.s32.totalorder %s18, 0
      %p109 = por %p107, %p108
      %p110 = scmp.ne.s32.totalorder %s96, %s97
      %p111 = scmp.eq.s32.totalorder %s19, 1
      %p112 = por %p110, %p111
      %p114 = scmp.ne.s32.totalorder %s97, %s113
      %p115 = scmp.eq.s32.totalorder %s19, 0
      %p116 = por %p114, %p115
      %s118 = sadd.s32 %s117, 1
      %p121 = scmp.eq.s32.totalorder %s13, 1
      %p122 = scmp.ne.s32.totalorder %s117, %s119
      %p123 = scmp.eq.s32.totalorder %s13, 0
      %p124 = por %p122, %p123
      %p125 = scmp.ne.s32.totalorder %s117, %s119
      %p126 = scmp.eq.s32.totalorder %s18, 1
      %p127 = por %p125, %p126
      %p128 = scmp.ne.s32.totalorder %s119, %s120
      %p129 = scmp.eq.s32.totalorder %s18, 0
      %p130 = por %p128, %p129
      %p131 = scmp.ne.s32.totalorder %s119, %s120
      %p132 = scmp.eq.s32.totalorder %s19, 1
      %p133 = por %p131, %p132
      %p135 = scmp.ne.s32.totalorder %s120, %s134
      %p136 = scmp.eq.s32.totalorder %s19, 0
      %p137 = por %p135, %p136
      %s138 = ssub.s32 %s20, %s32
      %s139 = ssub.s32 %s21, %s28
      %s140 = sor.u32 %s138, %s139
      %p141 = scmp.eq.s32.totalorder %s140, 0
      %s143 = sadd.s32 %s142, 1
      %s144 = scalar_select %p141, %s142, %s143
      %p147 = pneg %p141
      %p148 = scmp.eq.s32.totalorder %s13, 1
      %p149 = por %p147, %p148
      %p150 = scmp.ne.s32.totalorder %s142, %s145
      %p151 = scmp.eq.s32.totalorder %s13, 0
      %p152 = por %p150, %p151
      %p153 = scmp.ne.s32.totalorder %s142, %s145
      %p154 = scmp.eq.s32.totalorder %s18, 1
      %p155 = por %p153, %p154
      %p156 = scmp.ne.s32.totalorder %s145, %s146
      %p157 = scmp.eq.s32.totalorder %s18, 0
      %p158 = por %p156, %p157
      %p159 = scmp.ne.s32.totalorder %s145, %s146
      %p160 = scmp.eq.s32.totalorder %s19, 1
      %p161 = por %p159, %p160
      %p163 = scmp.ne.s32.totalorder %s146, %s162
      %p164 = scmp.eq.s32.totalorder %s19, 0
      %p165 = por %p163, %p164
      %p166 = scmp.le.s32.totalorder 1, %s13
      %p167 = scmp.lt.s32.totalorder %s13, 3
      %p168 = pnand %p166, %p167
      %p169 = pneg %p168
      // Predicated region
      $region9: #{tpu_custom_call.1} parent=5 // pred_check
        _
      $region10: #{tpu_custom_call.1} parent=5 // pred_check_branch
        %171 = sbr.rel (%p168) target = $region12
      $region11: #{tpu_custom_call.1} parent=5 // pred_region
        %s172 = ssub.s32 %s13, 1
        // Predicated region
        $region13: #{tpu_custom_call.1} parent=11 // pred_check
          %p173 = pneg %p130
        $region14: #{tpu_custom_call.1} parent=11 // pred_check_branch
          %175 = sbr.rel (%p173) target = $region16
        $region15: #{tpu_custom_call.1} parent=11 // pred_region
          _
        $region16: #{tpu_custom_call.1} parent=11 // pred_fallthru
          _
      $region12: #{tpu_custom_call.1} parent=5 // pred_fallthru
        _
      %p176 = scmp.lt.s32.totalorder %s13, 2
      // Predicated region
      $region17: #{tpu_custom_call.1} parent=5 // pred_check
        %p177 = pneg %p176
      $region18: #{tpu_custom_call.1} parent=5 // pred_check_branch
        %179 = sbr.rel (%p177) target = $region20
      $region19: #{tpu_custom_call.1} parent=5 // pred_region
        // Predicated region
        $region21: #{tpu_custom_call.1} parent=19 // pred_check
          %p180 = pneg %p47
        $region22: #{tpu_custom_call.1} parent=19 // pred_check_branch
          %182 = sbr.rel (%p180) target = $region24
        $region23: #{tpu_custom_call.1} parent=19 // pred_region
          %s183 = smul.u32 2, %s20
          %p184 = scmp.lt.s32.totalorder %s21, 1
          %s185 = scalar_select %p184, %s21, 1
          %p186 = scmp.lt.s32.totalorder %s183, 1
          %s187 = scalar_select %p186, %s183, 1
          %s188 = smul.addr %s185, 2
          %s189 = sadd.s32 %s187, %s188
          %s190 = scalar_lea.vmem %s0, %s189
          %s191 = smul.u32 2, %s20
        $region24: #{tpu_custom_call.1} parent=19 // pred_fallthru
          _
        // Predicated region
        $region25: #{tpu_custom_call.1} parent=19 // pred_check
          %p192 = pneg %p75
        $region26: #{tpu_custom_call.1} parent=19 // pred_check_branch
          %194 = sbr.rel (%p192) target = $region28
        $region27: #{tpu_custom_call.1} parent=19 // pred_region
          %s195 = smul.u32 2, %s20
          %p196 = scmp.lt.s32.totalorder %s21, 1
          %s197 = scalar_select %p196, %s21, 1
          %p198 = scmp.lt.s32.totalorder %s195, 1
          %s199 = scalar_select %p198, %s195, 1
          %s200 = smul.addr %s197, 4
          %s201 = sadd.s32 %s199, %s200
          %s202 = smul.addr %s201, 8
          %s203 = scalar_lea.vmem %s1, %s202
          %s204 = smul.u32 2, %s20
        $region28: #{tpu_custom_call.1} parent=19 // pred_fallthru
          _
        // Predicated region
        $region29: #{tpu_custom_call.1} parent=19 // pred_check
          %p205 = pneg %p103
        $region30: #{tpu_custom_call.1} parent=19 // pred_check_branch
          %207 = sbr.rel (%p205) target = $region32
        $region31: #{tpu_custom_call.1} parent=19 // pred_region
          %s208 = smul.u32 2, %s20
          %p209 = scmp.lt.s32.totalorder %s21, 1
          %s210 = scalar_select %p209, %s21, 1
          %p211 = scmp.lt.s32.totalorder %s208, 1
          %s212 = scalar_select %p211, %s208, 1
          %s213 = smul.addr %s210, 2
          %s214 = sadd.s32 %s212, %s213
          %s215 = smul.addr %s214, 8
          %s216 = scalar_lea.vmem %s2, %s215
          %s217 = smul.u32 2, %s20
        $region32: #{tpu_custom_call.1} parent=19 // pred_fallthru
          _
      $region20: #{tpu_custom_call.1} parent=5 // pred_fallthru
        _
      %p218 = scmp.le.s32.totalorder 1, %s13
      %p219 = scmp.lt.s32.totalorder %s13, 3
      %p220 = pnand %p218, %p219
      %p221 = pneg %p220
      // Predicated region
      $region33: #{tpu_custom_call.1} parent=5 // pred_check
        _
      $region34: #{tpu_custom_call.1} parent=5 // pred_check_branch
        %223 = sbr.rel (%p220) target = $region36
      $region35: #{tpu_custom_call.1} parent=5 // pred_region
        %s224 = ssub.s32 %s13, 1
        %s225 = smul.u32 2, %s22
        %p226 = scmp.lt.s32.totalorder %s23, 1
        %s227 = scalar_select %p226, %s23, 1
        %p228 = scmp.lt.s32.totalorder %s225, 1
        %s229 = scalar_select %p228, %s225, 1
        %s230 = smul.addr %s227, 2
        %s231 = sadd.s32 %s229, %s230
        %s232 = scalar_lea.vmem %s0, %s231
        %p233 = pneg %p53
        %p234 = pneg %p50
        %s235 = smul.u32 2, %s22
        %p236 = scmp.lt.s32.totalorder %s23, 1
        %s237 = scalar_select %p236, %s23, 1
        %p238 = scmp.lt.s32.totalorder %s235, 1
        %s239 = scalar_select %p238, %s235, 1
        %s240 = smul.addr %s237, 4
        %s241 = sadd.s32 %s239, %s240
        %s242 = smul.addr %s241, 8
        %s243 = scalar_lea.vmem %s1, %s242
        %p244 = pneg %p81
        %p245 = pneg %p78
        %s246 = smul.u32 2, %s22
        %p247 = scmp.lt.s32.totalorder %s23, 1
        %s248 = scalar_select %p247, %s23, 1
        %p249 = scmp.lt.s32.totalorder %s246, 1
        %s250 = scalar_select %p249, %s246, 1
        %s251 = smul.addr %s248, 2
        %s252 = sadd.s32 %s250, %s251
        %s253 = smul.addr %s252, 8
        %s254 = scalar_lea.vmem %s2, %s253
        %p255 = pneg %p109
        %p256 = pneg %p106
        %p257 = pneg %p130
        %p258 = pneg %p127
        %p259 = pneg %p158
        %p260 = pneg %p155
        %s261 = sand.u32 %s145, 1
        %s262 = scalar_lea.sflag [#allocation3], %s261
        %s263 = sand.u32 %s145, 1
        %s264 = smul.addr %s263, 2
        %s265 = scalar_lea.vmem [#allocation2], %s264
        %s266 = smul.u32 2, %s22
        %p267 = scmp.lt.s32.totalorder %s23, 1
        %s268 = scalar_select %p267, %s23, 1
        %p269 = scmp.lt.s32.totalorder %s266, 1
        %s270 = scalar_select %p269, %s266, 1
        %s271 = smul.addr %s268, 2
        %s272 = sadd.s32 %s270, %s271
        %s273 = scalar_lea.vmem %s0, %s272
        %s274 = smul.u32 2, %s22
        %s275 = smul.u32 2, %s22
        %p276 = scmp.lt.s32.totalorder %s23, 1
        %s277 = scalar_select %p276, %s23, 1
        %p278 = scmp.lt.s32.totalorder %s275, 1
        %s279 = scalar_select %p278, %s275, 1
        %s280 = smul.addr %s277, 4
        %s281 = sadd.s32 %s279, %s280
        %s282 = smul.addr %s281, 8
        %s283 = scalar_lea.vmem %s1, %s282
        %s284 = smul.u32 2, %s22
        %s285 = smul.u32 2, %s22
        %p286 = scmp.lt.s32.totalorder %s23, 1
        %s287 = scalar_select %p286, %s23, 1
        %p288 = scmp.lt.s32.totalorder %s285, 1
        %s289 = scalar_select %p288, %s285, 1
        %s290 = smul.addr %s287, 2
        %s291 = sadd.s32 %s289, %s290
        %s292 = smul.addr %s291, 8
        %s293 = scalar_lea.vmem %s2, %s292
        %s294 = smul.u32 2, %s22
        %v295 = vld [vmem:[%s273] sm:$0x3]
        %v296 = vld [vmem:[%s283] sm:$0xff]
        %v297 = vld [vmem:[%s283 + $0x8] sm:$0xff]
        %v298 = vld [vmem:[%s283 + $0x10] sm:$0x3]
        %v299 = vld [vmem:[%s283 + $0x18] sm:$0x3]
        %v300 = vld [vmem:[%s293] sm:$0x3f]
        %v301 = vld [vmem:[%s293 + $0x8] sm:$0x3f]
        %v302 = vld [vmem:[%s3] sm:$0x3f]
        %vm303 = vcmp.ne.s32.totalorder %v295, 255
        %vm304 = vcmp.ge.s32.totalorder %v295, 6
        %vm305 = vmand %vm303, %vm304
        %vm306 = vcmp.lt.s32.totalorder %v295, 6
        %vm307 = vmand %vm303, %vm306
        %vm308 = vcmask 1045504
        %v309 = vsel %vm308, %v300, -inf
        %v310 = vrot.slane %v309, 4
        %v311 = vmax.f32 %v309, %v310
        %v312 = vrot.slane %v311, 2
        %v313 = vmax.f32 %v311, %v312
        %v314 = vrot.slane %v313, 1
        %v315 = vmax.f32 %v313, %v314
        %v316 = vsel %vm308, %v301, -inf
        %v317 = vrot.slane %v316, 4
        %v318 = vmax.f32 %v316, %v317
        %v319 = vrot.slane %v318, 2
        %v320 = vmax.f32 %v318, %v319
        %v321 = vrot.slane %v320, 1
        %v322 = vmax.f32 %v320, %v321
        %v323 = vsub.f32 %v300, %v315
        %v324 = vsub.f32 %v301, %v322
        %v325 = vmul.f32 %v323, 1.442695
        %v326 = vpow.pop %v325
        %v327 = vmul.f32 %v324, 1.442695
        %v328 = vpow.pop %v327
        %v329 = vsel %vm308, %v326, 0.0
        %v330 = vrot.slane %v329, 4
        %v331 = vadd.f32 %v329, %v330
        %v332 = vrot.slane %v331, 2
        %v333 = vadd.f32 %v331, %v332
        %v334 = vrot.slane %v333, 1
        %v335 = vadd.f32 %v333, %v334
        %v336 = vsel %vm308, %v328, 0.0
        %v337 = vrot.slane %v336, 4
        %v338 = vadd.f32 %v336, %v337
        %v339 = vrot.slane %v338, 2
        %v340 = vadd.f32 %v338, %v339
        %v341 = vrot.slane %v340, 1
        %v342 = vadd.f32 %v340, %v341
        %vm343 = vcmp.ne.f32.partialorder %v300, %v315
        %vm344 = vcmp.ne.f32.partialorder %v301, %v322
        %vm345 = vcmask 1041408
        %v346 = vsel %vm345, %v298, -inf
        %v347 = vmax.f32 %v296, %v346
        %v348 = vrot.slane %v347, 4
        %v349 = vmax.f32 %v347, %v348
        %v350 = vrot.slane %v349, 2
        %v351 = vmax.f32 %v349, %v350
        %v352 = vrot.slane %v351, 1
        %v353 = vmax.f32 %v351, %v352
        %v354 = vsel %vm345, %v299, -inf
        %v355 = vmax.f32 %v297, %v354
        %v356 = vrot.slane %v355, 4
        %v357 = vmax.f32 %v355, %v356
        %v358 = vrot.slane %v357, 2
        %v359 = vmax.f32 %v357, %v358
        %v360 = vrot.slane %v359, 1
        %v361 = vmax.f32 %v359, %v360
        %v362 = vsub.f32 %v296, %v353
        %v363 = vsub.f32 %v297, %v361
        %v364 = vsub.f32 %v298, %v353
        %v365 = vsub.f32 %v299, %v361
        %v366 = vmul.f32 %v362, 1.442695
        %v367 = vpow.pop %v366
        %v368 = vmul.f32 %v363, 1.442695
        %v369 = vpow.pop %v368
        %v370 = vmul.f32 %v364, 1.442695
        %v371 = vpow.pop %v370
        %v372 = vmul.f32 %v365, 1.442695
        %v373 = vpow.pop %v372
        %v374 = vsel %vm345, %v371, 0.0
        %v375 = vadd.f32 %v367, %v374
        %v376 = vrot.slane %v375, 4
        %v377 = vadd.f32 %v375, %v376
        %v378 = vrot.slane %v377, 2
        %v379 = vadd.f32 %v377, %v378
        %v380 = vrot.slane %v379, 1
        %v381 = vadd.f32 %v379, %v380
        %v382 = vsel %vm345, %v373, 0.0
        %v383 = vadd.f32 %v369, %v382
        %v384 = vrot.slane %v383, 4
        %v385 = vadd.f32 %v383, %v384
        %v386 = vrot.slane %v385, 2
        %v387 = vadd.f32 %v385, %v386
        %v388 = vrot.slane %v387, 1
        %v389 = vadd.f32 %v387, %v388
        %v390 = vlog2.pop %v381
        %v391 = vmul.f32 %v390, 0.6931472
        %v392 = vlog2.pop %v389
        %v393 = vmul.f32 %v392, 0.6931472
        %v394 = vadd.f32 %v353, %v391
        %v395 = vadd.f32 %v361, %v393
        %v396 = vsub.f32 %v296, %v394
        %v397 = vsub.f32 %v297, %v395
        %v398 = vmul.f32 %v326, %v396
        %v399 = vmul.f32 %v328, %v397
        %v400 = vsel %vm308, %v398, 0.0
        %v401 = vrot.slane %v400, 4
        %v402 = vadd.f32 %v400, %v401
        %v403 = vrot.slane %v402, 2
        %v404 = vadd.f32 %v402, %v403
        %v405 = vrot.slane %v404, 1
        %v406 = vadd.f32 %v404, %v405
        %v407 = vsel %vm308, %v399, 0.0
        %v408 = vrot.slane %v407, 4
        %v409 = vadd.f32 %v407, %v408
        %v410 = vrot.slane %v409, 2
        %v411 = vadd.f32 %v409, %v410
        %v412 = vrot.slane %v411, 1
        %v413 = vadd.f32 %v411, %v412
        %v414 = vsub.f32 %v406, %v398
        %v415 = vsub.f32 %v413, %v399
        %417 = vset.pattern.permute.xlu0 0
        %418 = vperm.xlu0 %417, %v302
        %v419 = vpop.permute.xlu0 %418
        %v421 = vmul.f32 %v419, %v398
        %v422 = vmul.f32 %v419, %v399
        %v423 = vsel %vm308, %v421, 0.0
        %v424 = vrot.slane %v423, 4
        %v425 = vadd.f32 %v423, %v424
        %v426 = vrot.slane %v425, 2
        %v427 = vadd.f32 %v425, %v426
        %v428 = vrot.slane %v427, 1
        %v429 = vadd.f32 %v427, %v428
        %v430 = vsel %vm308, %v422, 0.0
        %v431 = vrot.slane %v430, 4
        %v432 = vadd.f32 %v430, %v431
        %v433 = vrot.slane %v432, 2
        %v434 = vadd.f32 %v432, %v433
        %v435 = vrot.slane %v434, 1
        %v436 = vadd.f32 %v434, %v435
        %v437 = vlaneseq
        %v438 = vshrl.u32 %v437, 7
        %v439 = vadd.s32 %v438, 8
        %v440 = vlaneseq
        %v441 = vshrl.u32 %v440, 7
        %v442 = vsub.s32 0, %v441
        %v443 = vrot.slane %v295, %v442
        %v444 = vlaneseq
        %v445 = vshrl.u32 %v444, 7
        %v446 = vsub.s32 1, %v445
        %v447 = vrot.slane %v295, %v446
        %vm448 = vcmp.eq.s32.totalorder %v438, %v443
        %vm449 = vcmp.eq.s32.totalorder %v438, %v447
        %vm450 = vcmp.eq.s32.totalorder %v439, %v443
        %vm451 = vcmp.eq.s32.totalorder %v439, %v447
        %v452 = vsel %vm448, %v296, 0.0
        %v453 = vsel %vm449, %v297, 0.0
        %v454 = vsel %vm450, %v298, 0.0
        %v455 = vsel %vm451, %v299, 0.0
        %v456 = vsel %vm345, %v454, 0.0
        %v457 = vadd.f32 %v452, %v456
        %v458 = vrot.slane %v457, 4
        %v459 = vadd.f32 %v457, %v458
        %v460 = vrot.slane %v459, 2
        %v461 = vadd.f32 %v459, %v460
        %v462 = vrot.slane %v461, 1
        %v463 = vadd.f32 %v461, %v462
        %v464 = vsel %vm345, %v455, 0.0
        %v465 = vadd.f32 %v453, %v464
        %v466 = vrot.slane %v465, 4
        %v467 = vadd.f32 %v465, %v466
        %v468 = vrot.slane %v467, 2
        %v469 = vadd.f32 %v467, %v468
        %v470 = vrot.slane %v469, 1
        %v471 = vadd.f32 %v469, %v470
        %v472 = vsub.f32 %v463, %v394
        %v473 = vsub.f32 %v471, %v395
        %v474 = vmul.f32 %v326, %v472
        %v475 = vmul.f32 %v328, %v473
        %v476 = vadd.f32 %v429, %v474
        %v477 = vadd.f32 %v436, %v475
        %v478 = vadd.f32 %v414, %v474
        %v479 = vadd.f32 %v415, %v475
        %v480 = vsel %vm343, %v476, %v478
        %v481 = vsel %vm344, %v477, %v479
        %v484 = vcombine.low %v406, %v413
        %v486 = vunpack.c.l.s4 1966171168
        %v487 = vunpack.c.0.s8 %v486
        %v488 = vlaneseq
        %v489 = vshrl.u32 %v488, 7
        %v490 = vsub.s32 %v487, %v489
        %v491 = vrot.slane %v484, %v490
        %v493 = vunpack.c.l.s4 1966171168
        %v494 = vunpack.c.0.s8 %v493
        %v495 = vlaneseq
        %v496 = vshrl.u32 %v495, 7
        %v497 = vsub.s32 %v494, %v496
        %v498 = vrot.slane %v491, %v497
        %v500 = vsel %vm307, %v498, 0.0
        %v501 = vmul.f32 %v480, 0.5
        %v502 = vmul.f32 %v481, 0.5
        %v505 = vcombine.low %v501, %v502
        %v507 = vunpack.c.l.s4 1966171168
        %v508 = vunpack.c.0.s8 %v507
        %v509 = vlaneseq
        %v510 = vshrl.u32 %v509, 7
        %v511 = vsub.s32 %v508, %v510
        %v512 = vrot.slane %v505, %v511
        %v514 = vunpack.c.l.s4 1966171168
        %v515 = vunpack.c.0.s8 %v514
        %v516 = vlaneseq
        %v517 = vshrl.u32 %v516, 7
        %v518 = vsub.s32 %v515, %v517
        %v519 = vrot.slane %v512, %v518
        %v521 = vsel %vm305, %v519, 0.0
        %v522 = vadd.f32 %v500, %v521
        %v525 = vcombine.low %v335, %v342
        %v527 = vunpack.c.l.s4 1966171168
        %v528 = vunpack.c.0.s8 %v527
        %v529 = vlaneseq
        %v530 = vshrl.u32 %v529, 7
        %v531 = vsub.s32 %v528, %v530
        %v532 = vrot.slane %v525, %v531
        %v534 = vunpack.c.l.s4 1966171168
        %v535 = vunpack.c.0.s8 %v534
        %v536 = vlaneseq
        %v537 = vshrl.u32 %v536, 7
        %v538 = vsub.s32 %v535, %v537
        %v539 = vrot.slane %v532, %v538
        %v541 = vrcp.pop %v539
        %v542 = vmul.f32 %v522, %v541
        %v543 = vlaneseq
        %vm544 = vcmp.ge.s32.totalorder %v543, 0
        %vm545 = vcmp.lt.s32.totalorder %v543, 256
        %vm546 = vmand %vm544, %vm545
        %547 = vst.msk [vmem:[%s265] sm:$0x3] %vm546, %v542
        %s548 = sand.u32 %s145, 1
        %s549 = scalar_lea.sflag [#allocation3], %s548
        %s550 = sand.u32 %s145, 1
        %s551 = smul.addr %s550, 2
        %s552 = scalar_lea.vmem [#allocation2], %s551
        // Predicated region
        $region37: #{tpu_custom_call.1} parent=35 // pred_check
          %p553 = pneg %p155
        $region38: #{tpu_custom_call.1} parent=35 // pred_check_branch
          %555 = sbr.rel (%p553) target = $region40
        $region39: #{tpu_custom_call.1} parent=35 // pred_region
          %s557 = ssub.s32 32, 32
          %558 = vsyncadd %s549, %s557
          %s559 = smul.addr %s23, 2
          %s560 = smul.addr %s22, 4
          %s561 = sadd.s32 %s559, %s560
          %s562 = smul.addr %s561, 16
          %s563 = scalar_lea.hbm %s4, %s562
          %s565 = sshll.u32 %s552, 4
          %s566 = int_to_ptr.vmem [resolvable:$true] %s565
          %568 = dma.vmem_to_hbm [thread:$0]  %s566, 32, %s563, %s549
        $region40: #{tpu_custom_call.1} parent=35 // pred_fallthru
          _
      $region36: #{tpu_custom_call.1} parent=5 // pred_fallthru
        _
      %p569 = scmp.le.s32.totalorder 2, %s13
      // Predicated region
      $region41: #{tpu_custom_call.1} parent=5 // pred_check
        %p570 = pneg %p569
      $region42: #{tpu_custom_call.1} parent=5 // pred_check_branch
        %572 = sbr.rel (%p570) target = $region44
      $region43: #{tpu_custom_call.1} parent=5 // pred_region
        %s573 = ssub.s32 %s13, 2
        // Predicated region
        $region45: #{tpu_custom_call.1} parent=43 // pred_check
          %p574 = pneg %p161
        $region46: #{tpu_custom_call.1} parent=43 // pred_check_branch
          %576 = sbr.rel (%p574) target = $region48
        $region47: #{tpu_custom_call.1} parent=43 // pred_region
          %s577 = sand.u32 %s146, 1
          %s578 = scalar_lea.sflag [#allocation3], %s577
          %s579 = sand.u32 %s146, 1
          %s580 = smul.addr %s579, 2
          %s581 = scalar_lea.vmem [#allocation2], %s580
          %582 = dma.done %s578, 32
        $region48: #{tpu_custom_call.1} parent=43 // pred_fallthru
          _
      $region44: #{tpu_custom_call.1} parent=5 // pred_fallthru
        _
    $region6: #{tpu_custom_call.1} parent=1 // loop_footer
      %s17 = sadd.s32 1, %s13
    $region7: #{tpu_custom_call.1} parent=1 // loop_footer_branch
      %12 = sbr.rel target = $region3
    $region8: #{tpu_custom_call.1} parent=1 // loop_exit
      _
    %583 = vsyncpa [#allocation3], 1
    %s584 = scalar_lea.sflag [#allocation3], 1
    %585 = vsyncpa %s584, 1

</llo_original>
